<compile_context>
chip_gen: v6e
topology: v6e:2x2x1
jax: 0.10.0
libtpu: 0.0.40
codegen_flags: <defaults>
</compile_context>

<pallas_src>
import math

import jax
import jax.numpy as jnp
from jax.experimental import pallas as pl
from jax.experimental.pallas import tpu as pltpu

KH = KW = 3
PAD = 1  # CoordConv's Conv2d is instantiated with kernel_size=3, stride=1, padding=1


def _make_coordconv_kernel(C, H, W, Bt, C2p, tap_dtype):
    C2 = C + 2
    HW = H * W
    N = Bt * HW          # lane extent of one grid step (batch chunks concatenated)

    def kernel(x_ref, coord_ref, mask_ref, w_ref, b_ref, o_ref, feat_ref, col_ref):
        # x_ref    : (Bt, C, HW)               input block
        # coord_ref: (2, N) f32                xx / yy rows (batch-invariant input)
        # mask_ref : (KH*KW*C2p, N) tap_dtype  per-tap boundary masks, pre-broadcast
        # w_ref    : (Cout, KH*KW*C2p) bf16    conv weight, tap-major columns
        # b_ref    : (Cout, 1) f32             bias
        # o_ref    : (Bt, Cout, HW)            lane-dense output block
        # feat_ref : VMEM (C2p, N) f32         AddCoords feature slab (pad rows = 0)
        # col_ref  : VMEM (KH*KW*C2p, N) bf16  im2col matrix

        # ---- stage the AddCoords feature slab (batch chunks along lanes) ----
        # TODO(synk): for C2p <= 8 this scratch round-trip could be skipped by
        # building `feat` as a value / writing straight into the centre-tap
        # rows of col_ref (review item 6, low priority).
        for bb in range(Bt):
            feat_ref[0:C, bb * HW:(bb + 1) * HW] = x_ref[bb].astype(jnp.float32)
        feat_ref[C:C2, :] = coord_ref[...]
        if C2p > C2:
            # Alignment-pad rows: their weight columns are zero, but keep them
            # finite so (0-weight * garbage) can never produce NaN.
            feat_ref[C2:C2p, :] = jnp.zeros((C2p - C2, N), jnp.float32)
        feat = feat_ref[...].astype(tap_dtype)               # (C2p, N)

        # ---- im2col: per tap one lane roll (XLU) + mask multiply (VPU) + store ----
        for kh in range(KH):
            for kw in range(KW):
                t = kh * KW + kw
                dh, dw = kh - PAD, kw - PAD
                delta = dh * W + dw                           # flat offset of this tap
                rows = slice(t * C2p, (t + 1) * C2p)
                if delta == 0:
                    # centre tap: mask is all ones, no shift needed
                    col_ref[rows, :] = feat.astype(jnp.bfloat16)
                else:
                    # shifted[p] == feat[p + delta]; wrap-around (including across
                    # batch chunks) only lands on positions whose mask is 0.
                    shifted = pltpu.roll(feat, (-delta) % N, axis=1)
                    col_ref[rows, :] = (shifted * mask_ref[rows, :]).astype(jnp.bfloat16)

        # ---- single fused MXU matmul (bf16 in, f32 accumulate) + bias ----
        acc = jnp.dot(w_ref[...], col_ref[...],
                      preferred_element_type=jnp.float32) + b_ref[...]   # (Cout, N)
        for bb in range(Bt):
            o_ref[bb] = acc[:, bb * HW:(bb + 1) * HW].astype(o_ref.dtype)

    return kernel


def _device_kind():
    try:
        return jax.devices()[0].device_kind.lower()
    except Exception:  # pragma: no cover
        return ""


def _default_grid_steps(B):
    # v7x has 2 TensorCores per chip: keep >=2 parallel grid steps there so the
    # batch axis shards across both; single-TC v5e/v6e collapse to one step.
    n_tc = 2 if "v7" in _device_kind() else 1
    g = min(B, n_tc)
    return g if (g > 0 and B % g == 0) else 1


def coord_conv(x_nchw, w_oihw, bias, *, grid_steps=None, tap_dtype=jnp.float32):
    """CoordConv forward (AddCoords + 3x3 / pad-1 conv + bias).

    x_nchw : (B, C, H, W)
    w_oihw : (Cout, C+2, KH, KW)  nn.Conv2d weight (PyTorch OIHW layout)
    bias   : (Cout,)
    grid_steps: how many grid steps the batch is split over (None = 1 on
        single-TC v5e/v6e, 2 on dual-TC v7x).
    tap_dtype : dtype of the roll/mask tap loop; jnp.bfloat16 halves VPU/XLU
        operand width on v6e/v7x, keep jnp.float32 on v5e (default).
    """
    B, C, H, W = x_nchw.shape
    Cout = w_oihw.shape[0]
    C2 = C + 2
    C2p = ((C2 + 7) // 8) * 8          # pad channel block to 8 sublanes
    HW = H * W
    K = KH * KW * C2p
    assert w_oihw.shape == (Cout, C2, KH, KW)

    if grid_steps is None:
        grid_steps = _default_grid_steps(B)
    assert B % grid_steps == 0, (B, grid_steps)
    Bt = B // grid_steps
    N = Bt * HW

    # ---- wrapper-side layout plumbing + batch-invariant precompute ----
    x_flat = x_nchw.reshape(B, C, HW)                     # lane-dense input

    w_taps = jnp.transpose(w_oihw, (0, 2, 3, 1))          # (Cout, KH, KW, C2)
    if C2p > C2:
        w_taps = jnp.pad(w_taps, ((0, 0), (0, 0), (0, 0), (0, C2p - C2)))
    # column index = (kh*KW + kw)*C2p + c  -> matches the im2col row layout.
    w_flat = w_taps.reshape(Cout, K).astype(jnp.bfloat16)
    b2 = bias.reshape(Cout, 1).astype(jnp.float32)

    # Coordinate rows.  Float division so H==1 / W==1 yields inf/nan at
    # runtime (PyTorch behaviour) instead of a trace-time ZeroDivisionError.
    xx = jnp.arange(H, dtype=jnp.float32) / jnp.float32(H - 1) * 2.0 - 1.0
    yy = jnp.arange(W, dtype=jnp.float32) / jnp.float32(W - 1) * 2.0 - 1.0
    coords = jnp.stack([jnp.repeat(xx, W), jnp.tile(yy, H)], axis=0)   # (2, HW)
    coords = jnp.tile(coords, (1, Bt)).astype(jnp.float32)             # (2, N)

    # Per-tap boundary masks, pre-broadcast over the C2p rows of each tap and
    # pre-tiled over the Bt batch chunks (review item 3).
    p = jnp.arange(HW, dtype=jnp.int32)
    hi, wi = p // W, p % W
    tap_masks = []
    for kh in range(KH):
        for kw in range(KW):
            dh, dw = kh - PAD, kw - PAD
            valid = ((hi + dh >= 0) & (hi + dh < H) &
                     (wi + dw >= 0) & (wi + dw < W)).astype(tap_dtype)
            tap_masks.append(jnp.broadcast_to(valid[None, :], (C2p, HW)))
    mask = jnp.tile(jnp.concatenate(tap_masks, axis=0), (1, Bt))       # (K, N)

    cost = pl.CostEstimate(
        flops=2 * B * Cout * K * HW,
        transcendentals=0,
        bytes_accessed=int(x_flat.size * x_flat.dtype.itemsize
                           + coords.size * coords.dtype.itemsize
                           + mask.size * mask.dtype.itemsize
                           + w_flat.size * w_flat.dtype.itemsize
                           + b2.size * b2.dtype.itemsize
                           + B * Cout * HW * x_nchw.dtype.itemsize))

    out_flat = pl.pallas_call(
        _make_coordconv_kernel(C, H, W, Bt, C2p, tap_dtype),
        out_shape=jax.ShapeDtypeStruct((B, Cout, HW), x_nchw.dtype),
        grid_spec=pltpu.PrefetchScalarGridSpec(
            num_scalar_prefetch=0,
            grid=(grid_steps,),
            in_specs=[
                pl.BlockSpec((Bt, C, HW), lambda g: (g, 0, 0)),
                # Batch-invariant inputs: constant block index -> streamed once.
                pl.BlockSpec((2, N), lambda g: (0, 0)),
                pl.BlockSpec((K, N), lambda g: (0, 0)),
                pl.BlockSpec((Cout, K), lambda g: (0, 0)),
                pl.BlockSpec((Cout, 1), lambda g: (0, 0)),
            ],
            out_specs=pl.BlockSpec((Bt, Cout, HW), lambda g: (g, 0, 0)),
            scratch_shapes=[
                pltpu.VMEM((C2p, N), jnp.float32),        # AddCoords feature slab
                pltpu.VMEM((K, N), jnp.bfloat16),         # im2col matrix
            ],
        ),
        compiler_params=pltpu.CompilerParams(
            # Batch axis is independent -> shards across both TCs on v7x.
            dimension_semantics=("parallel",),
            vmem_limit_bytes=32 * 1024 * 1024,
        ),
        cost_estimate=cost,
    )(x_flat, coords, mask, w_flat, b2)
    return out_flat.reshape(B, Cout, H, W)


def ref_coord_conv(x_nchw, w_oihw, bias, compute_dtype=jnp.float32):
    """Pure-JAX reference (AddCoords + lax.conv), f32 accumulation."""
    B, C, H, W = x_nchw.shape
    xx = jnp.arange(H, dtype=jnp.float32) / jnp.float32(H - 1) * 2.0 - 1.0
    yy = jnp.arange(W, dtype=jnp.float32) / jnp.float32(W - 1) * 2.0 - 1.0
    xx = jnp.broadcast_to(xx[None, None, :, None], (B, 1, H, W))
    yy = jnp.broadcast_to(yy[None, None, None, :], (B, 1, H, W))
    feat = jnp.concatenate([x_nchw.astype(jnp.float32), xx, yy], axis=1)
    out = jax.lax.conv_general_dilated(
        feat.astype(compute_dtype), w_oihw.astype(compute_dtype),
        window_strides=(1, 1), padding=((PAD, PAD), (PAD, PAD)),
        dimension_numbers=('NCHW', 'OIHW', 'NCHW'),
        preferred_element_type=jnp.float32)
    return (out + bias[None, :, None, None]).astype(x_nchw.dtype)


if __name__ == "__main__":
    key = jax.random.PRNGKey(0)
    kx, kwt, kb = jax.random.split(key, 3)

    B, C, H, W = 2, 4, 16, 16
    Cout = 8
    C2 = C + 2

    x = jax.random.normal(kx, (B, C, H, W), jnp.float32)

    # Deterministic synthetic params, shapes match nn.Conv2d(C+2, Cout, 3, padding=1).
    fan_in = C2 * KH * KW
    bound = 1.0 / math.sqrt(fan_in)
    w = jax.random.uniform(kwt, (Cout, C2, KH, KW), jnp.float32, -bound, bound)
    b = jax.random.uniform(kb, (Cout,), jnp.float32, -bound, bound)

    out = coord_conv(x, w, b)
    out = jax.block_until_ready(out)
    assert out.shape == (B, Cout, H, W), out.shape

    # Reference with the same bf16-input / f32-accumulate MXU contraction.
    ref = ref_coord_conv(x, w, b, compute_dtype=jnp.bfloat16)
    err = float(jnp.max(jnp.abs(out - ref)))
    assert jnp.allclose(out, ref, atol=1e-3, rtol=1e-3), err
    print("KERNEL_OK")
</pallas_src>

<mosaic_0001>
module attributes {stable_mosaic.version = 11 : i64} {
  func.func @kernel(%arg0: i32, %arg1: memref<2x4x256xf32, #tpu.memory_space<vmem>>, %arg2: memref<2x512xf32, #tpu.memory_space<vmem>>, %arg3: memref<72x512xf32, #tpu.memory_space<vmem>>, %arg4: memref<8x72xbf16, #tpu.memory_space<vmem>>, %arg5: memref<8x1xf32, #tpu.memory_space<vmem>>, %arg6: memref<2x8x256xf32, #tpu.memory_space<vmem>>, %arg7: memref<8x512xf32, #tpu.memory_space<vmem>>, %arg8: memref<72x512xbf16, #tpu.memory_space<vmem>>) attributes {dimension_semantics = [#tpu.dimension_semantics<parallel>], iteration_bounds = array<i64: 1>, scalar_prefetch = 0 : i64, scratch_operands = 2 : i64, tpu.core_type = #tpu.core_type<tc>, window_params = [{transform_indices = @transform_0, window_bounds = array<i64: 2, 4, 256>}, {pipeline_mode = #tpu.pipeline_mode<synchronous>, transform_indices = @transform_1, window_bounds = array<i64: 2, 512>}, {pipeline_mode = #tpu.pipeline_mode<synchronous>, transform_indices = @transform_2, window_bounds = array<i64: 72, 512>}, {pipeline_mode = #tpu.pipeline_mode<synchronous>, transform_indices = @transform_3, window_bounds = array<i64: 8, 72>}, {pipeline_mode = #tpu.pipeline_mode<synchronous>, transform_indices = @transform_4, window_bounds = array<i64: 8, 1>}, {transform_indices = @transform_5, window_bounds = array<i64: 2, 8, 256>}]} {
    %c0 = arith.constant 0 : index
    %c0_0 = arith.constant 0 : index
    %c0_1 = arith.constant 0 : index
    %0 = vector.load %arg1[%c0, %c0_0, %c0_1] : memref<2x4x256xf32, #tpu.memory_space<vmem>>, vector<1x4x256xf32>
    %1 = vector.shape_cast %0 : vector<1x4x256xf32> to vector<4x256xf32>
    %c0_2 = arith.constant 0 : index
    %c0_3 = arith.constant 0 : index
    %2 = vector.load %arg7[%c0_2, %c0_3] : memref<8x512xf32, #tpu.memory_space<vmem>>, vector<4x256xf32>
    tpu.vector_store %arg7[%c0_2, %c0_3], %1 {strides = array<i32>} : memref<8x512xf32, #tpu.memory_space<vmem>>, vector<4x256xf32>,
    %c1 = arith.constant 1 : index
    %c0_4 = arith.constant 0 : index
    %c0_5 = arith.constant 0 : index
    %3 = vector.load %arg1[%c1, %c0_4, %c0_5] : memref<2x4x256xf32, #tpu.memory_space<vmem>>, vector<1x4x256xf32>
    %4 = vector.shape_cast %3 : vector<1x4x256xf32> to vector<4x256xf32>
    %c0_6 = arith.constant 0 : index
    %c256 = arith.constant 256 : index
    %5 = vector.load %arg7[%c0_6, %c256] : memref<8x512xf32, #tpu.memory_space<vmem>>, vector<4x256xf32>
    tpu.vector_store %arg7[%c0_6, %c256], %4 {strides = array<i32>} : memref<8x512xf32, #tpu.memory_space<vmem>>, vector<4x256xf32>,
    %c0_7 = arith.constant 0 : index
    %c0_8 = arith.constant 0 : index
    %6 = vector.load %arg2[%c0_7, %c0_8] : memref<2x512xf32, #tpu.memory_space<vmem>>, vector<2x512xf32>
    %c4 = arith.constant 4 : index
    %c0_9 = arith.constant 0 : index
    %7 = vector.load %arg7[%c4, %c0_9] : memref<8x512xf32, #tpu.memory_space<vmem>>, vector<2x512xf32>
    tpu.vector_store %arg7[%c4, %c0_9], %6 {strides = array<i32>} : memref<8x512xf32, #tpu.memory_space<vmem>>, vector<2x512xf32>,
    %cst = arith.constant 0.000000e+00 : f32
    %8 = vector.broadcast %cst : f32 to vector<2x512xf32>
    %c6 = arith.constant 6 : index
    %c0_10 = arith.constant 0 : index
    %9 = vector.load %arg7[%c6, %c0_10] : memref<8x512xf32, #tpu.memory_space<vmem>>, vector<2x512xf32>
    tpu.vector_store %arg7[%c6, %c0_10], %8 {strides = array<i32>} : memref<8x512xf32, #tpu.memory_space<vmem>>, vector<2x512xf32>,
    %c0_11 = arith.constant 0 : index
    %c0_12 = arith.constant 0 : index
    %10 = vector.load %arg7[%c0_11, %c0_12] : memref<8x512xf32, #tpu.memory_space<vmem>>, vector<8x512xf32>
    %c17_i32 = arith.constant 17 : i32
    %11 = tpu.dynamic_rotate %10 by %c17_i32 dim 1 : vector<8x512xf32>, i32 -> vector<8x512xf32>
    %c0_13 = arith.constant 0 : index
    %c0_14 = arith.constant 0 : index
    %12 = vector.load %arg3[%c0_13, %c0_14] : memref<72x512xf32, #tpu.memory_space<vmem>>, vector<8x512xf32>
    %13 = arith.mulf %11, %12 : vector<8x512xf32>
    %14 = arith.truncf %13 : vector<8x512xf32> to vector<8x512xbf16>
    %c0_15 = arith.constant 0 : index
    %c0_16 = arith.constant 0 : index
    %15 = vector.load %arg8[%c0_15, %c0_16] : memref<72x512xbf16, #tpu.memory_space<vmem>>, vector<8x512xbf16>
    tpu.vector_store %arg8[%c0_15, %c0_16], %14 {strides = array<i32>} : memref<72x512xbf16, #tpu.memory_space<vmem>>, vector<8x512xbf16>,
    %c16_i32 = arith.constant 16 : i32
    %16 = tpu.dynamic_rotate %10 by %c16_i32 dim 1 : vector<8x512xf32>, i32 -> vector<8x512xf32>
    %c8 = arith.constant 8 : index
    %c0_17 = arith.constant 0 : index
    %17 = vector.load %arg3[%c8, %c0_17] : memref<72x512xf32, #tpu.memory_space<vmem>>, vector<8x512xf32>
    %18 = arith.mulf %16, %17 : vector<8x512xf32>
    %19 = arith.truncf %18 : vector<8x512xf32> to vector<8x512xbf16>
    %c8_18 = arith.constant 8 : index
    %c0_19 = arith.constant 0 : index
    %20 = vector.load %arg8[%c8_18, %c0_19] : memref<72x512xbf16, #tpu.memory_space<vmem>>, vector<8x512xbf16>
    tpu.vector_store %arg8[%c8_18, %c0_19], %19 {strides = array<i32>} : memref<72x512xbf16, #tpu.memory_space<vmem>>, vector<8x512xbf16>,
    %c15_i32 = arith.constant 15 : i32
    %21 = tpu.dynamic_rotate %10 by %c15_i32 dim 1 : vector<8x512xf32>, i32 -> vector<8x512xf32>
    %c16 = arith.constant 16 : index
    %c0_20 = arith.constant 0 : index
    %22 = vector.load %arg3[%c16, %c0_20] : memref<72x512xf32, #tpu.memory_space<vmem>>, vector<8x512xf32>
    %23 = arith.mulf %21, %22 : vector<8x512xf32>
    %24 = arith.truncf %23 : vector<8x512xf32> to vector<8x512xbf16>
    %c16_21 = arith.constant 16 : index
    %c0_22 = arith.constant 0 : index
    %25 = vector.load %arg8[%c16_21, %c0_22] : memref<72x512xbf16, #tpu.memory_space<vmem>>, vector<8x512xbf16>
    tpu.vector_store %arg8[%c16_21, %c0_22], %24 {strides = array<i32>} : memref<72x512xbf16, #tpu.memory_space<vmem>>, vector<8x512xbf16>,
    %c1_i32 = arith.constant 1 : i32
    %26 = tpu.dynamic_rotate %10 by %c1_i32 dim 1 : vector<8x512xf32>, i32 -> vector<8x512xf32>
    %c24 = arith.constant 24 : index
    %c0_23 = arith.constant 0 : index
    %27 = vector.load %arg3[%c24, %c0_23] : memref<72x512xf32, #tpu.memory_space<vmem>>, vector<8x512xf32>
    %28 = arith.mulf %26, %27 : vector<8x512xf32>
    %29 = arith.truncf %28 : vector<8x512xf32> to vector<8x512xbf16>
    %c24_24 = arith.constant 24 : index
    %c0_25 = arith.constant 0 : index
    %30 = vector.load %arg8[%c24_24, %c0_25] : memref<72x512xbf16, #tpu.memory_space<vmem>>, vector<8x512xbf16>
    tpu.vector_store %arg8[%c24_24, %c0_25], %29 {strides = array<i32>} : memref<72x512xbf16, #tpu.memory_space<vmem>>, vector<8x512xbf16>,
    %31 = arith.truncf %10 : vector<8x512xf32> to vector<8x512xbf16>
    %c32 = arith.constant 32 : index
    %c0_26 = arith.constant 0 : index
    %32 = vector.load %arg8[%c32, %c0_26] : memref<72x512xbf16, #tpu.memory_space<vmem>>, vector<8x512xbf16>
    tpu.vector_store %arg8[%c32, %c0_26], %31 {strides = array<i32>} : memref<72x512xbf16, #tpu.memory_space<vmem>>, vector<8x512xbf16>,
    %c511_i32 = arith.constant 511 : i32
    %33 = tpu.dynamic_rotate %10 by %c511_i32 dim 1 : vector<8x512xf32>, i32 -> vector<8x512xf32>
    %c40 = arith.constant 40 : index
    %c0_27 = arith.constant 0 : index
    %34 = vector.load %arg3[%c40, %c0_27] : memref<72x512xf32, #tpu.memory_space<vmem>>, vector<8x512xf32>
    %35 = arith.mulf %33, %34 : vector<8x512xf32>
    %36 = arith.truncf %35 : vector<8x512xf32> to vector<8x512xbf16>
    %c40_28 = arith.constant 40 : index
    %c0_29 = arith.constant 0 : index
    %37 = vector.load %arg8[%c40_28, %c0_29] : memref<72x512xbf16, #tpu.memory_space<vmem>>, vector<8x512xbf16>
    tpu.vector_store %arg8[%c40_28, %c0_29], %36 {strides = array<i32>} : memref<72x512xbf16, #tpu.memory_space<vmem>>, vector<8x512xbf16>,
    %c497_i32 = arith.constant 497 : i32
    %38 = tpu.dynamic_rotate %10 by %c497_i32 dim 1 : vector<8x512xf32>, i32 -> vector<8x512xf32>
    %c48 = arith.constant 48 : index
    %c0_30 = arith.constant 0 : index
    %39 = vector.load %arg3[%c48, %c0_30] : memref<72x512xf32, #tpu.memory_space<vmem>>, vector<8x512xf32>
    %40 = arith.mulf %38, %39 : vector<8x512xf32>
    %41 = arith.truncf %40 : vector<8x512xf32> to vector<8x512xbf16>
    %c48_31 = arith.constant 48 : index
    %c0_32 = arith.constant 0 : index
    %42 = vector.load %arg8[%c48_31, %c0_32] : memref<72x512xbf16, #tpu.memory_space<vmem>>, vector<8x512xbf16>
    tpu.vector_store %arg8[%c48_31, %c0_32], %41 {strides = array<i32>} : memref<72x512xbf16, #tpu.memory_space<vmem>>, vector<8x512xbf16>,
    %c496_i32 = arith.constant 496 : i32
    %43 = tpu.dynamic_rotate %10 by %c496_i32 dim 1 : vector<8x512xf32>, i32 -> vector<8x512xf32>
    %c56 = arith.constant 56 : index
    %c0_33 = arith.constant 0 : index
    %44 = vector.load %arg3[%c56, %c0_33] : memref<72x512xf32, #tpu.memory_space<vmem>>, vector<8x512xf32>
    %45 = arith.mulf %43, %44 : vector<8x512xf32>
    %46 = arith.truncf %45 : vector<8x512xf32> to vector<8x512xbf16>
    %c56_34 = arith.constant 56 : index
    %c0_35 = arith.constant 0 : index
    %47 = vector.load %arg8[%c56_34, %c0_35] : memref<72x512xbf16, #tpu.memory_space<vmem>>, vector<8x512xbf16>
    tpu.vector_store %arg8[%c56_34, %c0_35], %46 {strides = array<i32>} : memref<72x512xbf16, #tpu.memory_space<vmem>>, vector<8x512xbf16>,
    %c495_i32 = arith.constant 495 : i32
    %48 = tpu.dynamic_rotate %10 by %c495_i32 dim 1 : vector<8x512xf32>, i32 -> vector<8x512xf32>
    %c64 = arith.constant 64 : index
    %c0_36 = arith.constant 0 : index
    %49 = vector.load %arg3[%c64, %c0_36] : memref<72x512xf32, #tpu.memory_space<vmem>>, vector<8x512xf32>
    %50 = arith.mulf %48, %49 : vector<8x512xf32>
    %51 = arith.truncf %50 : vector<8x512xf32> to vector<8x512xbf16>
    %c64_37 = arith.constant 64 : index
    %c0_38 = arith.constant 0 : index
    %52 = vector.load %arg8[%c64_37, %c0_38] : memref<72x512xbf16, #tpu.memory_space<vmem>>, vector<8x512xbf16>
    tpu.vector_store %arg8[%c64_37, %c0_38], %51 {strides = array<i32>} : memref<72x512xbf16, #tpu.memory_space<vmem>>, vector<8x512xbf16>,
    %c0_39 = arith.constant 0 : index
    %c0_40 = arith.constant 0 : index
    %53 = vector.load %arg4[%c0_39, %c0_40] : memref<8x72xbf16, #tpu.memory_space<vmem>>, vector<8x72xbf16>
    %c0_41 = arith.constant 0 : index
    %c0_42 = arith.constant 0 : index
    %54 = vector.load %arg8[%c0_41, %c0_42] : memref<72x512xbf16, #tpu.memory_space<vmem>>, vector<72x512xbf16>
    %cst_43 = arith.constant dense<0.000000e+00> : vector<8x512xf32>
    %55 = tpu.matmul %53, %54, %cst_43 {dimension_numbers = #tpu.dot_dimension_numbers<[1], [0], [0], [1], [0, 0, 1, 1], [], []>} : vector<8x72xbf16>, vector<72x512xbf16>, vector<8x512xf32> -> vector<8x512xf32>
    %c0_44 = arith.constant 0 : index
    %c0_45 = arith.constant 0 : index
    %56 = vector.load %arg5[%c0_44, %c0_45] : memref<8x1xf32, #tpu.memory_space<vmem>>, vector<8x1xf32>
    %57 = vector.broadcast %56 : vector<8x1xf32> to vector<8x512xf32>
    %58 = arith.addf %55, %57 : vector<8x512xf32>
    %59 = vector.extract_strided_slice %58 {offsets = [0, 0], sizes = [8, 256], strides = [1, 1]} : vector<8x512xf32> to vector<8x256xf32>
    %c0_46 = arith.constant 0 : index
    %c0_47 = arith.constant 0 : index
    %c0_48 = arith.constant 0 : index
    %60 = vector.load %arg6[%c0_46, %c0_47, %c0_48] : memref<2x8x256xf32, #tpu.memory_space<vmem>>, vector<1x8x256xf32>
    %61 = vector.shape_cast %60 : vector<1x8x256xf32> to vector<8x256xf32>
    %62 = vector.shape_cast %59 : vector<8x256xf32> to vector<1x8x256xf32>
    tpu.vector_store %arg6[%c0_46, %c0_47, %c0_48], %62 {strides = array<i32>} : memref<2x8x256xf32, #tpu.memory_space<vmem>>, vector<1x8x256xf32>,
    %63 = vector.extract_strided_slice %58 {offsets = [0, 256], sizes = [8, 256], strides = [1, 1]} : vector<8x512xf32> to vector<8x256xf32>
    %c1_49 = arith.constant 1 : index
    %c0_50 = arith.constant 0 : index
    %c0_51 = arith.constant 0 : index
    %64 = vector.load %arg6[%c1_49, %c0_50, %c0_51] : memref<2x8x256xf32, #tpu.memory_space<vmem>>, vector<1x8x256xf32>
    %65 = vector.shape_cast %64 : vector<1x8x256xf32> to vector<8x256xf32>
    %66 = vector.shape_cast %63 : vector<8x256xf32> to vector<1x8x256xf32>
    tpu.vector_store %arg6[%c1_49, %c0_50, %c0_51], %66 {strides = array<i32>} : memref<2x8x256xf32, #tpu.memory_space<vmem>>, vector<1x8x256xf32>,
    return
  }
  func.func @transform_0(%arg0: i32) -> (i32, i32, i32) {
    %c0_i32 = arith.constant 0 : i32
    %c0_i32_0 = arith.constant 0 : i32
    %c0_i32_1 = arith.constant 0 : i32
    return %arg0, %c0_i32, %c0_i32_0 : i32, i32, i32
  }
  func.func @transform_1(%arg0: i32) -> (i32, i32) {
    %c0_i32 = arith.constant 0 : i32
    %c0_i32_0 = arith.constant 0 : i32
    %c0_i32_1 = arith.constant 0 : i32
    return %c0_i32, %c0_i32_0 : i32, i32
  }
  func.func @transform_2(%arg0: i32) -> (i32, i32) {
    %c0_i32 = arith.constant 0 : i32
    %c0_i32_0 = arith.constant 0 : i32
    %c0_i32_1 = arith.constant 0 : i32
    return %c0_i32, %c0_i32_0 : i32, i32
  }
  func.func @transform_3(%arg0: i32) -> (i32, i32) {
    %c0_i32 = arith.constant 0 : i32
    %c0_i32_0 = arith.constant 0 : i32
    %c0_i32_1 = arith.constant 0 : i32
    return %c0_i32, %c0_i32_0 : i32, i32
  }
  func.func @transform_4(%arg0: i32) -> (i32, i32) {
    %c0_i32 = arith.constant 0 : i32
    %c0_i32_0 = arith.constant 0 : i32
    %c0_i32_1 = arith.constant 0 : i32
    return %c0_i32, %c0_i32_0 : i32, i32
  }
  func.func @transform_5(%arg0: i32) -> (i32, i32, i32) {
    %c0_i32 = arith.constant 0 : i32
    %c0_i32_0 = arith.constant 0 : i32
    %c0_i32_1 = arith.constant 0 : i32
    return %arg0, %c0_i32, %c0_i32_0 : i32, i32, i32
  }
}

</mosaic_0001>

<llo_original>
// kernel: tpu_custom_call.1
$region0: #{tpu_custom_call.1}
  #allocation0 [shape = 'u32[]', space=smem, size = 0x4, offset = 0x4, fixed_abs, tag = 'smem constant byte address 0x4 - core index']
  #allocation1 [shape = 'u32[144,128]{1,0:T(1,128)}', space=vmem, size = 0x12000, scoped, tag = 'internal scratch']
  #allocation2 [shape = 'f32[8,512]{1,0:T(8,128)}', space=vmem, size = 0x4000, scoped, tag = 'scratch operand']
  #allocation3 [shape = 'bf16[72,512]{1,0:T(8,128)(2,1)}', space=vmem, size = 0x12000, scoped, tag = 'scratch operand']
  %s0 = inlined_call_operand.hbm [shape: f32[2,4,256], index: 0, kind: input, shape index: {}]
  %s1 = inlined_call_operand.vmem [shape: f32[2,512], index: 1, kind: input, shape index: {}]
  %s2 = inlined_call_operand.hbm [shape: f32[72,512], index: 2, kind: input, shape index: {}]
  %s3 = inlined_call_operand.vmem [shape: bf16[8,72], index: 3, kind: input, shape index: {}]
  %s4 = inlined_call_operand.vmem [shape: f32[8,1], index: 4, kind: input, shape index: {}]
  %s5 = inlined_call_operand.hbm [shape: f32[2,8,256], index: 5, kind: output, shape index: {}]
  %s6 = sld [smem:[#allocation0]]
  $region38: #{tpu_custom_call.1} parent=0
    _
  %s8 = ssub.s32 1, %s6
  %s9 = scalar_select 0, %s8, %s6
  $region1: #{tpu_custom_call.1} parent=0
    #allocation4 [shape = 'u8[8192]{0}', space=vmem, size = 0x2000, scoped, tag = 'input window, operand 0, single buffered']
    #allocation5 [shape = 's32[1]{0}', space=sflag, size = 0x4, scoped, tag = 'scoped memory for tpu_custom_call.1']
    #allocation6 [shape = 's32[1]{0}', space=sflag, size = 0x4, scoped, tag = 'scoped memory for tpu_custom_call.1']
    #allocation7 [shape = 'u8[147456]{0}', space=vmem, size = 0x24000, scoped, tag = 'input window, operand 2, single buffered']
    #allocation8 [shape = 's32[1]{0}', space=sflag, size = 0x4, scoped, tag = 'scoped memory for tpu_custom_call.1']
    #allocation9 [shape = 'u8[16384]{0}', space=vmem, size = 0x4000, scoped, tag = 'output window, operand 0, single buffered']
    %10 = vsyncpa [#allocation5], 0
    %11 = vsyncpa [#allocation8], 0
    %12 = vsyncpa [#allocation6], 0
    // Predicated region
    $region2: #{tpu_custom_call.1} parent=1 // pred_check
      _
    $region3: #{tpu_custom_call.1} parent=1 // pred_check_branch
      %14 = sbr.rel (0) target = $region5
    $region4: #{tpu_custom_call.1} parent=1 // pred_region
      %s16 = ssub.s32 256, 256
      %17 = vsyncadd [#allocation5], %s16
      %s18 = sshll.u32 [#allocation4], 4
      %s19 = int_to_ptr.vmem [resolvable:$true] %s18
      %24 = dma.hbm_to_vmem [thread:$0]  %s0, 256, %s19, [#allocation5], 128, 128, 8
    $region5: #{tpu_custom_call.1} parent=1 // pred_fallthru
      _
    // Predicated region
    $region6: #{tpu_custom_call.1} parent=1 // pred_check
      _
    $region7: #{tpu_custom_call.1} parent=1 // pred_check_branch
      %26 = sbr.rel (0) target = $region9
    $region8: #{tpu_custom_call.1} parent=1 // pred_region
      _
    $region9: #{tpu_custom_call.1} parent=1 // pred_fallthru
      _
    // Predicated region
    $region10: #{tpu_custom_call.1} parent=1 // pred_check
      _
    $region11: #{tpu_custom_call.1} parent=1 // pred_check_branch
      %28 = sbr.rel (0) target = $region13
    $region12: #{tpu_custom_call.1} parent=1 // pred_region
      %s30 = ssub.s32 4608, 4608
      %31 = vsyncadd [#allocation8], %s30
      %s32 = sshll.u32 [#allocation7], 4
      %s33 = int_to_ptr.vmem [resolvable:$true] %s32
      %38 = dma.hbm_to_vmem [thread:$0]  %s2, 4608, %s33, [#allocation8], 512, 512, 32
    $region13: #{tpu_custom_call.1} parent=1 // pred_fallthru
      _
    // Predicated region
    $region14: #{tpu_custom_call.1} parent=1 // pred_check
      _
    $region15: #{tpu_custom_call.1} parent=1 // pred_check_branch
      %40 = sbr.rel (0) target = $region17
    $region16: #{tpu_custom_call.1} parent=1 // pred_region
      _
    $region17: #{tpu_custom_call.1} parent=1 // pred_fallthru
      _
    // Predicated region
    $region18: #{tpu_custom_call.1} parent=1 // pred_check
      _
    $region19: #{tpu_custom_call.1} parent=1 // pred_check_branch
      %42 = sbr.rel (0) target = $region21
    $region20: #{tpu_custom_call.1} parent=1 // pred_region
      _
    $region21: #{tpu_custom_call.1} parent=1 // pred_fallthru
      _
    // Predicated region
    $region22: #{tpu_custom_call.1} parent=1 // pred_check
      _
    $region23: #{tpu_custom_call.1} parent=1 // pred_check_branch
      %44 = sbr.rel (0) target = $region25
    $region24: #{tpu_custom_call.1} parent=1 // pred_region
      %45 = dma.done [#allocation5], 256
    $region25: #{tpu_custom_call.1} parent=1 // pred_fallthru
      _
    // Predicated region
    $region26: #{tpu_custom_call.1} parent=1 // pred_check
      _
    $region27: #{tpu_custom_call.1} parent=1 // pred_check_branch
      %47 = sbr.rel (0) target = $region29
    $region28: #{tpu_custom_call.1} parent=1 // pred_region
      %48 = dma.done [#allocation8], 4608
    $region29: #{tpu_custom_call.1} parent=1 // pred_fallthru
      _
    %v50 = vld [vmem:[#allocation4] sm:$0xff]
    %v52 = vcombine.high %v50, %v50
    %54 = vst [vmem:[#allocation2] sm:$0xf] %v50
    %55 = vst [vmem:[#allocation2 + $0x8] sm:$0xf] %v52
    %s56 = scalar_lea.vmem [#allocation4], 8
    %v57 = vld [vmem:[%s56] sm:$0xff]
    %v59 = vcombine.high %v57, %v57
    %61 = vst [vmem:[#allocation2 + $0x10] sm:$0xf] %v57
    %62 = vst [vmem:[#allocation2 + $0x18] sm:$0xf] %v59
    %v63 = vld [vmem:[%s1] sm:$0xff]
    %v65 = vcombine.high %v63, %v63
    %v67 = vunpack.c.l.s4 1983009808
    %v68 = vunpack.c.0.s8 %v67
    %v69 = vlaneseq
    %v70 = vshrl.u32 %v69, 7
    %v71 = vsub.s32 %v68, %v70
    %v72 = vrot.slane %v63, %v71
    %v74 = vunpack.c.l.s4 1983009808
    %v75 = vunpack.c.0.s8 %v74
    %v76 = vlaneseq
    %v77 = vshrl.u32 %v76, 7
    %v78 = vsub.s32 %v75, %v77
    %v79 = vrot.slane %v65, %v78
    %v80 = vcombine.low %v72, %v72
    %v81 = vcombine.low %v79, %v79
    %86 = vst [vmem:[#allocation2] sm:$0x30] %v80
    %87 = vst [vmem:[#allocation2 + $0x8] sm:$0x30] %v72
    %88 = vst [vmem:[#allocation2 + $0x10] sm:$0x30] %v81
    %89 = vst [vmem:[#allocation2 + $0x18] sm:$0x30] %v79
    %90 = vst [vmem:[#allocation2] sm:$0xc0] 0.0
    %91 = vst [vmem:[#allocation2 + $0x8] sm:$0xc0] 0.0
    %92 = vst [vmem:[#allocation2 + $0x10] sm:$0xc0] 0.0
    %93 = vst [vmem:[#allocation2 + $0x18] sm:$0xc0] 0.0
    %v94 = vld [vmem:[#allocation2] sm:$0xff]
    %v95 = vld [vmem:[#allocation2 + $0x8] sm:$0xff]
    %v96 = vld [vmem:[#allocation2 + $0x10] sm:$0xff]
    %v97 = vld [vmem:[#allocation2 + $0x18] sm:$0xff]
    %98 = vrot.lane.b32.xlu0 %v94, 17
    %v99 = vpop.permute.xlu0 %98
    %100 = vrot.lane.b32.xlu0 %v95, 17
    %v101 = vpop.permute.xlu0 %100
    %102 = vrot.lane.b32.xlu0 %v96, 17
    %v103 = vpop.permute.xlu0 %102
    %104 = vrot.lane.b32.xlu0 %v97, 17
    %v105 = vpop.permute.xlu0 %104
    %v106 = vlaneseq
    %v107 = vand.u32 %v106, 127
    %vm108 = vcmp.lt.s32.totalorder %v107, 17
    %v109 = vsel %vm108, %v103, %v105
    %v110 = vsel %vm108, %v101, %v103
    %v111 = vsel %vm108, %v99, %v101
    %v112 = vsel %vm108, %v105, %v99
    %v113 = vld [vmem:[#allocation7] sm:$0xff]
    %v114 = vld [vmem:[#allocation7 + $0x8] sm:$0xff]
    %v115 = vld [vmem:[#allocation7 + $0x10] sm:$0xff]
    %v116 = vld [vmem:[#allocation7 + $0x18] sm:$0xff]
    %v117 = vmul.f32 %v112, %v113
    %v118 = vmul.f32 %v111, %v114
    %v119 = vmul.f32 %v110, %v115
    %v120 = vmul.f32 %v109, %v116
    %v121 = vpack.c.bf16 %v117, %v117
    %v122 = vpack.c.bf16 %v118, %v118
    %v123 = vpack.c.bf16 %v119, %v119
    %v124 = vpack.c.bf16 %v120, %v120
    %v129 = vunpack.c.l.b16 %v121
    %v130 = vunpack.c.l.b16 %v122
    %v131 = vunpack.c.l.b16 %v123
    %v132 = vunpack.c.l.b16 %v124
    %v133 = vpack.c.b16 %v130, %v129
    %v134 = vpack.c.b16 %v132, %v131
    %137 = vst [vmem:[#allocation3] sm:$0xff] %v133
    %138 = vst [vmem:[#allocation3 + $0x8] sm:$0xff] %v134
    %139 = vrot.lane.b32.xlu0 %v94, 16
    %v140 = vpop.permute.xlu0 %139
    %141 = vrot.lane.b32.xlu0 %v95, 16
    %v142 = vpop.permute.xlu0 %141
    %143 = vrot.lane.b32.xlu0 %v96, 16
    %v144 = vpop.permute.xlu0 %143
    %145 = vrot.lane.b32.xlu0 %v97, 16
    %v146 = vpop.permute.xlu0 %145
    %vm147 = vcmp.lt.s32.totalorder %v107, 16
    %v148 = vsel %vm147, %v144, %v146
    %v149 = vsel %vm147, %v142, %v144
    %v150 = vsel %vm147, %v140, %v142
    %v151 = vsel %vm147, %v146, %v140
    %v152 = vld [vmem:[#allocation7 + $0x20] sm:$0xff]
    %v153 = vld [vmem:[#allocation7 + $0x28] sm:$0xff]
    %v154 = vld [vmem:[#allocation7 + $0x30] sm:$0xff]
    %v155 = vld [vmem:[#allocation7 + $0x38] sm:$0xff]
    %v156 = vmul.f32 %v151, %v152
    %v157 = vmul.f32 %v150, %v153
    %v158 = vmul.f32 %v149, %v154
    %v159 = vmul.f32 %v148, %v155
    %v160 = vpack.c.bf16 %v156, %v156
    %v161 = vpack.c.bf16 %v157, %v157
    %v162 = vpack.c.bf16 %v158, %v158
    %v163 = vpack.c.bf16 %v159, %v159
    %v168 = vunpack.c.l.b16 %v160
    %v169 = vunpack.c.l.b16 %v161
    %v170 = vunpack.c.l.b16 %v162
    %v171 = vunpack.c.l.b16 %v163
    %v172 = vpack.c.b16 %v169, %v168
    %v173 = vpack.c.b16 %v171, %v170
    %176 = vst [vmem:[#allocation3 + $0x10] sm:$0xff] %v172
    %177 = vst [vmem:[#allocation3 + $0x18] sm:$0xff] %v173
    %178 = vrot.lane.b32.xlu0 %v94, 15
    %v179 = vpop.permute.xlu0 %178
    %180 = vrot.lane.b32.xlu0 %v95, 15
    %v181 = vpop.permute.xlu0 %180
    %182 = vrot.lane.b32.xlu0 %v96, 15
    %v183 = vpop.permute.xlu0 %182
    %184 = vrot.lane.b32.xlu0 %v97, 15
    %v185 = vpop.permute.xlu0 %184
    %vm186 = vcmp.lt.s32.totalorder %v107, 15
    %v187 = vsel %vm186, %v183, %v185
    %v188 = vsel %vm186, %v181, %v183
    %v189 = vsel %vm186, %v179, %v181
    %v190 = vsel %vm186, %v185, %v179
    %v191 = vld [vmem:[#allocation7 + $0x40] sm:$0xff]
    %v192 = vld [vmem:[#allocation7 + $0x48] sm:$0xff]
    %v193 = vld [vmem:[#allocation7 + $0x50] sm:$0xff]
    %v194 = vld [vmem:[#allocation7 + $0x58] sm:$0xff]
    %v195 = vmul.f32 %v190, %v191
    %v196 = vmul.f32 %v189, %v192
    %v197 = vmul.f32 %v188, %v193
    %v198 = vmul.f32 %v187, %v194
    %v199 = vpack.c.bf16 %v195, %v195
    %v200 = vpack.c.bf16 %v196, %v196
    %v201 = vpack.c.bf16 %v197, %v197
    %v202 = vpack.c.bf16 %v198, %v198
    %v207 = vunpack.c.l.b16 %v199
    %v208 = vunpack.c.l.b16 %v200
    %v209 = vunpack.c.l.b16 %v201
    %v210 = vunpack.c.l.b16 %v202
    %v211 = vpack.c.b16 %v208, %v207
    %v212 = vpack.c.b16 %v210, %v209
    %215 = vst [vmem:[#allocation3 + $0x20] sm:$0xff] %v211
    %216 = vst [vmem:[#allocation3 + $0x28] sm:$0xff] %v212
    %217 = vrot.lane.b32.xlu0 %v94, 1
    %v218 = vpop.permute.xlu0 %217
    %219 = vrot.lane.b32.xlu0 %v95, 1
    %v220 = vpop.permute.xlu0 %219
    %221 = vrot.lane.b32.xlu0 %v96, 1
    %v222 = vpop.permute.xlu0 %221
    %223 = vrot.lane.b32.xlu0 %v97, 1
    %v224 = vpop.permute.xlu0 %223
    %vm225 = vcmp.lt.s32.totalorder %v107, 1
    %v226 = vsel %vm225, %v222, %v224
    %v227 = vsel %vm225, %v220, %v222
    %v228 = vsel %vm225, %v218, %v220
    %v229 = vsel %vm225, %v224, %v218
    %v230 = vld [vmem:[#allocation7 + $0x60] sm:$0xff]
    %v231 = vld [vmem:[#allocation7 + $0x68] sm:$0xff]
    %v232 = vld [vmem:[#allocation7 + $0x70] sm:$0xff]
    %v233 = vld [vmem:[#allocation7 + $0x78] sm:$0xff]
    %v234 = vmul.f32 %v229, %v230
    %v235 = vmul.f32 %v228, %v231
    %v236 = vmul.f32 %v227, %v232
    %v237 = vmul.f32 %v226, %v233
    %v238 = vpack.c.bf16 %v234, %v234
    %v239 = vpack.c.bf16 %v235, %v235
    %v240 = vpack.c.bf16 %v236, %v236
    %v241 = vpack.c.bf16 %v237, %v237
    %v246 = vunpack.c.l.b16 %v238
    %v247 = vunpack.c.l.b16 %v239
    %v248 = vunpack.c.l.b16 %v240
    %v249 = vunpack.c.l.b16 %v241
    %v250 = vpack.c.b16 %v247, %v246
    %v251 = vpack.c.b16 %v249, %v248
    %254 = vst [vmem:[#allocation3 + $0x30] sm:$0xff] %v250
    %255 = vst [vmem:[#allocation3 + $0x38] sm:$0xff] %v251
    %v256 = vpack.c.bf16 %v94, %v94
    %v257 = vpack.c.bf16 %v95, %v95
    %v258 = vpack.c.bf16 %v96, %v96
    %v259 = vpack.c.bf16 %v97, %v97
    %v264 = vunpack.c.l.b16 %v256
    %v265 = vunpack.c.l.b16 %v257
    %v266 = vunpack.c.l.b16 %v258
    %v267 = vunpack.c.l.b16 %v259
    %v268 = vpack.c.b16 %v265, %v264
    %v269 = vpack.c.b16 %v267, %v266
    %272 = vst [vmem:[#allocation3 + $0x40] sm:$0xff] %v268
    %273 = vst [vmem:[#allocation3 + $0x48] sm:$0xff] %v269
    %274 = vrot.lane.b32.xlu0 %v94, 127
    %v275 = vpop.permute.xlu0 %274
    %276 = vrot.lane.b32.xlu0 %v95, 127
    %v277 = vpop.permute.xlu0 %276
    %278 = vrot.lane.b32.xlu0 %v96, 127
    %v279 = vpop.permute.xlu0 %278
    %280 = vrot.lane.b32.xlu0 %v97, 127
    %v281 = vpop.permute.xlu0 %280
    %vm282 = vcmp.lt.s32.totalorder %v107, 127
    %v283 = vsel %vm282, %v279, %v281
    %v284 = vsel %vm282, %v277, %v279
    %v285 = vsel %vm282, %v275, %v277
    %v286 = vsel %vm282, %v281, %v275
    %v287 = vld [vmem:[#allocation7 + $0xa0] sm:$0xff]
    %v288 = vld [vmem:[#allocation7 + $0xa8] sm:$0xff]
    %v289 = vld [vmem:[#allocation7 + $0xb0] sm:$0xff]
    %v290 = vld [vmem:[#allocation7 + $0xb8] sm:$0xff]
    %v291 = vmul.f32 %v285, %v287
    %v292 = vmul.f32 %v284, %v288
    %v293 = vmul.f32 %v283, %v289
    %v294 = vmul.f32 %v286, %v290
    %v295 = vpack.c.bf16 %v291, %v291
    %v296 = vpack.c.bf16 %v292, %v292
    %v297 = vpack.c.bf16 %v293, %v293
    %v298 = vpack.c.bf16 %v294, %v294
    %v303 = vunpack.c.l.b16 %v295
    %v304 = vunpack.c.l.b16 %v296
    %v305 = vunpack.c.l.b16 %v297
    %v306 = vunpack.c.l.b16 %v298
    %v307 = vpack.c.b16 %v304, %v303
    %v308 = vpack.c.b16 %v306, %v305
    %311 = vst [vmem:[#allocation3 + $0x50] sm:$0xff] %v307
    %312 = vst [vmem:[#allocation3 + $0x58] sm:$0xff] %v308
    %313 = vrot.lane.b32.xlu0 %v94, 113
    %v314 = vpop.permute.xlu0 %313
    %315 = vrot.lane.b32.xlu0 %v95, 113
    %v316 = vpop.permute.xlu0 %315
    %317 = vrot.lane.b32.xlu0 %v96, 113
    %v318 = vpop.permute.xlu0 %317
    %319 = vrot.lane.b32.xlu0 %v97, 113
    %v320 = vpop.permute.xlu0 %319
    %vm321 = vcmp.lt.s32.totalorder %v107, 113
    %v322 = vsel %vm321, %v318, %v320
    %v323 = vsel %vm321, %v316, %v318
    %v324 = vsel %vm321, %v314, %v316
    %v325 = vsel %vm321, %v320, %v314
    %v326 = vld [vmem:[#allocation7 + $0xc0] sm:$0xff]
    %v327 = vld [vmem:[#allocation7 + $0xc8] sm:$0xff]
    %v328 = vld [vmem:[#allocation7 + $0xd0] sm:$0xff]
    %v329 = vld [vmem:[#allocation7 + $0xd8] sm:$0xff]
    %v330 = vmul.f32 %v324, %v326
    %v331 = vmul.f32 %v323, %v327
    %v332 = vmul.f32 %v322, %v328
    %v333 = vmul.f32 %v325, %v329
    %v334 = vpack.c.bf16 %v330, %v330
    %v335 = vpack.c.bf16 %v331, %v331
    %v336 = vpack.c.bf16 %v332, %v332
    %v337 = vpack.c.bf16 %v333, %v333
    %v342 = vunpack.c.l.b16 %v334
    %v343 = vunpack.c.l.b16 %v335
    %v344 = vunpack.c.l.b16 %v336
    %v345 = vunpack.c.l.b16 %v337
    %v346 = vpack.c.b16 %v343, %v342
    %v347 = vpack.c.b16 %v345, %v344
    %350 = vst [vmem:[#allocation3 + $0x60] sm:$0xff] %v346
    %351 = vst [vmem:[#allocation3 + $0x68] sm:$0xff] %v347
    %352 = vrot.lane.b32.xlu0 %v94, 112
    %v353 = vpop.permute.xlu0 %352
    %354 = vrot.lane.b32.xlu0 %v95, 112
    %v355 = vpop.permute.xlu0 %354
    %356 = vrot.lane.b32.xlu0 %v96, 112
    %v357 = vpop.permute.xlu0 %356
    %358 = vrot.lane.b32.xlu0 %v97, 112
    %v359 = vpop.permute.xlu0 %358
    %vm360 = vcmp.lt.s32.totalorder %v107, 112
    %v361 = vsel %vm360, %v357, %v359
    %v362 = vsel %vm360, %v355, %v357
    %v363 = vsel %vm360, %v353, %v355
    %v364 = vsel %vm360, %v359, %v353
    %v365 = vld [vmem:[#allocation7 + $0xe0] sm:$0xff]
    %v366 = vld [vmem:[#allocation7 + $0xe8] sm:$0xff]
    %v367 = vld [vmem:[#allocation7 + $0xf0] sm:$0xff]
    %v368 = vld [vmem:[#allocation7 + $0xf8] sm:$0xff]
    %v369 = vmul.f32 %v363, %v365
    %v370 = vmul.f32 %v362, %v366
    %v371 = vmul.f32 %v361, %v367
    %v372 = vmul.f32 %v364, %v368
    %v373 = vpack.c.bf16 %v369, %v369
    %v374 = vpack.c.bf16 %v370, %v370
    %v375 = vpack.c.bf16 %v371, %v371
    %v376 = vpack.c.bf16 %v372, %v372
    %v381 = vunpack.c.l.b16 %v373
    %v382 = vunpack.c.l.b16 %v374
    %v383 = vunpack.c.l.b16 %v375
    %v384 = vunpack.c.l.b16 %v376
    %v385 = vpack.c.b16 %v382, %v381
    %v386 = vpack.c.b16 %v384, %v383
    %389 = vst [vmem:[#allocation3 + $0x70] sm:$0xff] %v385
    %390 = vst [vmem:[#allocation3 + $0x78] sm:$0xff] %v386
    %391 = vrot.lane.b32.xlu0 %v94, 111
    %v392 = vpop.permute.xlu0 %391
    %393 = vrot.lane.b32.xlu0 %v95, 111
    %v394 = vpop.permute.xlu0 %393
    %395 = vrot.lane.b32.xlu0 %v96, 111
    %v396 = vpop.permute.xlu0 %395
    %397 = vrot.lane.b32.xlu0 %v97, 111
    %v398 = vpop.permute.xlu0 %397
    %vm399 = vcmp.lt.s32.totalorder %v107, 111
    %v400 = vsel %vm399, %v396, %v398
    %v401 = vsel %vm399, %v394, %v396
    %v402 = vsel %vm399, %v392, %v394
    %v403 = vsel %vm399, %v398, %v392
    %v404 = vld [vmem:[#allocation7 + $0x100] sm:$0xff]
    %v405 = vld [vmem:[#allocation7 + $0x108] sm:$0xff]
    %v406 = vld [vmem:[#allocation7 + $0x110] sm:$0xff]
    %v407 = vld [vmem:[#allocation7 + $0x118] sm:$0xff]
    %v408 = vmul.f32 %v402, %v404
    %v409 = vmul.f32 %v401, %v405
    %v410 = vmul.f32 %v400, %v406
    %v411 = vmul.f32 %v403, %v407
    %v412 = vpack.c.bf16 %v408, %v408
    %v413 = vpack.c.bf16 %v409, %v409
    %v414 = vpack.c.bf16 %v410, %v410
    %v415 = vpack.c.bf16 %v411, %v411
    %v420 = vunpack.c.l.b16 %v412
    %v421 = vunpack.c.l.b16 %v413
    %v422 = vunpack.c.l.b16 %v414
    %v423 = vunpack.c.l.b16 %v415
    %v424 = vpack.c.b16 %v421, %v420
    %v425 = vpack.c.b16 %v423, %v422
    %428 = vst [vmem:[#allocation3 + $0x80] sm:$0xff] %v424
    %429 = vst [vmem:[#allocation3 + $0x88] sm:$0xff] %v425
    %v430 = vld [vmem:[%s3] sm:$0xf]
    %v431 = vld [vmem:[#allocation3] sm:$0xff]
    %v432 = vld [vmem:[#allocation3 + $0x8] sm:$0xff]
    %v433 = vld [vmem:[#allocation3 + $0x10] sm:$0xff]
    %v434 = vld [vmem:[#allocation3 + $0x18] sm:$0xff]
    %v435 = vld [vmem:[#allocation3 + $0x20] sm:$0xff]
    %v436 = vld [vmem:[#allocation3 + $0x28] sm:$0xff]
    %v437 = vld [vmem:[#allocation3 + $0x30] sm:$0xff]
    %v438 = vld [vmem:[#allocation3 + $0x38] sm:$0xff]
    %v439 = vld [vmem:[#allocation3 + $0x40] sm:$0xff]
    %v440 = vld [vmem:[#allocation3 + $0x48] sm:$0xff]
    %v441 = vld [vmem:[#allocation3 + $0x50] sm:$0xff]
    %v442 = vld [vmem:[#allocation3 + $0x58] sm:$0xff]
    %v443 = vld [vmem:[#allocation3 + $0x60] sm:$0xff]
    %v444 = vld [vmem:[#allocation3 + $0x68] sm:$0xff]
    %v445 = vld [vmem:[#allocation3 + $0x70] sm:$0xff]
    %v446 = vld [vmem:[#allocation3 + $0x78] sm:$0xff]
    %v447 = vld [vmem:[#allocation3 + $0x80] sm:$0xff]
    %v448 = vld [vmem:[#allocation3 + $0x88] sm:$0xff]
    %v449 = vld [vmem:[%s4] sm:$0xff]
    %451 = vset.pattern.permute.xlu0 0
    %452 = vperm.xlu0 %451, %v449
    %v453 = vpop.permute.xlu0 %452
    %v473 = vunpack.c.l.b16 %v431
    %v474 = vunpack.c.h.b16 %v431
    %v475 = vunpack.c.l.b16 %v432
    %v476 = vunpack.c.h.b16 %v432
    %v477 = vunpack.c.l.b16 %v433
    %v478 = vunpack.c.h.b16 %v433
    %v479 = vunpack.c.l.b16 %v434
    %v480 = vunpack.c.h.b16 %v434
    %v481 = vunpack.c.l.b16 %v435
    %v482 = vunpack.c.h.b16 %v435
    %v483 = vunpack.c.l.b16 %v436
    %v484 = vunpack.c.h.b16 %v436
    %v485 = vunpack.c.l.b16 %v437
    %v486 = vunpack.c.h.b16 %v437
    %v487 = vunpack.c.l.b16 %v438
    %v488 = vunpack.c.h.b16 %v438
    %v489 = vunpack.c.l.b16 %v439
    %v490 = vunpack.c.h.b16 %v439
    %v491 = vunpack.c.l.b16 %v440
    %v492 = vunpack.c.h.b16 %v440
    %v493 = vunpack.c.l.b16 %v441
    %v494 = vunpack.c.h.b16 %v441
    %v495 = vunpack.c.l.b16 %v442
    %v496 = vunpack.c.h.b16 %v442
    %v497 = vunpack.c.l.b16 %v443
    %v498 = vunpack.c.h.b16 %v443
    %v499 = vunpack.c.l.b16 %v444
    %v500 = vunpack.c.h.b16 %v444
    %v501 = vunpack.c.l.b16 %v445
    %v502 = vunpack.c.h.b16 %v445
    %v503 = vunpack.c.l.b16 %v446
    %v504 = vunpack.c.h.b16 %v446
    %v505 = vunpack.c.l.b16 %v447
    %v506 = vunpack.c.h.b16 %v447
    %v507 = vunpack.c.l.b16 %v448
    %v508 = vunpack.c.h.b16 %v448
    %v509 = vpack.c.b16 %v477, %v473
    %v510 = vpack.c.b16 %v478, %v474
    %v511 = vpack.c.b16 %v479, %v475
    %v512 = vpack.c.b16 %v480, %v476
    %v513 = vpack.c.b16 %v485, %v481
    %v514 = vpack.c.b16 %v486, %v482
    %v515 = vpack.c.b16 %v487, %v483
    %v516 = vpack.c.b16 %v488, %v484
    %v517 = vpack.c.b16 %v493, %v489
    %v518 = vpack.c.b16 %v494, %v490
    %v519 = vpack.c.b16 %v495, %v491
    %v520 = vpack.c.b16 %v496, %v492
    %v521 = vpack.c.b16 %v501, %v497
    %v522 = vpack.c.b16 %v502, %v498
    %v523 = vpack.c.b16 %v503, %v499
    %v524 = vpack.c.b16 %v504, %v500
    %v525 = vpack.c.b16 %v505, %v505
    %v526 = vpack.c.b16 %v506, %v506
    %v527 = vpack.c.b16 %v507, %v507
    %v528 = vpack.c.b16 %v508, %v508
    %vm545 = vcmask 588800
    %v547 = vsel %vm545, %v430, 0
    %vm549 = vcmask 1043456
    %v551 = vsel %vm549, %v525, 0
    %v554 = vsel %vm549, %v526, 0
    %v557 = vsel %vm549, %v527, 0
    %v560 = vsel %vm549, %v528, 0
    %562 = vmatprep.subr.bf16.mxu0 0
    %563 = vmatpush1.bf16.msra.mxu0 0
    %564 = vmatprep.subr.bf16.mxu0 0
    %565 = vmatpush1.bf16.msra.mxu0 0
    %566 = vmatprep.subr.bf16.mxu0 0
    %567 = vmatpush1.bf16.msra.mxu0 0
    %568 = vmatprep.subr.bf16.mxu0 %v554
    %569 = vmatpush1.bf16.msra.mxu0 %v551
    %570 = vmatprep.subr.bf16.mxu0 %v522
    %571 = vmatpush1.bf16.msra.mxu0 %v521
    %572 = vmatprep.subr.bf16.mxu0 %v518
    %573 = vmatpush1.bf16.msra.mxu0 %v517
    %574 = vmatprep.subr.bf16.mxu0 %v514
    %575 = vmatpush1.bf16.msra.mxu0 %v513
    %576 = vmatprep.subr.bf16.mxu0 %v510
    %577 = vmatpush1.bf16.msra.mxu0 %v509
    %578 = vmatprep.subr.bf16.mxu0 0
    %579 = vmatpush2.bf16.msra.mxu0 0
    %580 = vmatprep.subr.bf16.mxu0 0
    %581 = vmatpush2.bf16.msra.mxu0 0
    %582 = vmatprep.subr.bf16.mxu0 0
    %583 = vmatpush2.bf16.msra.mxu0 0
    %584 = vmatprep.subr.bf16.mxu0 0
    %585 = vmatpush2.bf16.msra.mxu0 0
    %586 = vmatprep.subr.bf16.mxu0 0
    %587 = vmatpush2.bf16.msra.mxu0 0
    %588 = vmatprep.subr.bf16.mxu0 0
    %589 = vmatpush2.bf16.msra.mxu0 0
    %590 = vmatprep.subr.bf16.mxu0 0
    %591 = vmatpush2.bf16.msra.mxu0 0
    %592 = vmatprep.subr.bf16.mxu0 0
    %593 = vmatpush2.bf16.msra.mxu0 0
    %594 = vmatprep.mubr.bf16.mxu0 0
    %595 = vmatmul.mubr.bf16.gmra.mxu0 %v547
    %v596 = vpop.f32.mrf.mxu0
    %v597 = vadd.f32 %v453, %v596
    %v598 = vpop.f32.mrf.mxu0
    %v599 = vadd.f32 %v453, %v598
    %v600 = vpop.f32.mrf.mxu0
    %v601 = vpop.f32.mrf.mxu0
    %602 = vdwg.mxu0
    %603 = vmatprep.subr.bf16.mxu0 0
    %604 = vmatpush1.bf16.msra.mxu0 0
    %605 = vmatprep.subr.bf16.mxu0 0
    %606 = vmatpush1.bf16.msra.mxu0 0
    %607 = vmatprep.subr.bf16.mxu0 0
    %608 = vmatpush1.bf16.msra.mxu0 0
    %609 = vmatprep.subr.bf16.mxu0 %v560
    %610 = vmatpush1.bf16.msra.mxu0 %v557
    %611 = vmatprep.subr.bf16.mxu0 %v524
    %612 = vmatpush1.bf16.msra.mxu0 %v523
    %613 = vmatprep.subr.bf16.mxu0 %v520
    %614 = vmatpush1.bf16.msra.mxu0 %v519
    %615 = vmatprep.subr.bf16.mxu0 %v516
    %616 = vmatpush1.bf16.msra.mxu0 %v515
    %617 = vmatprep.subr.bf16.mxu0 %v512
    %618 = vmatpush1.bf16.msra.mxu0 %v511
    %619 = vmatprep.subr.bf16.mxu0 0
    %620 = vmatpush2.bf16.msra.mxu0 0
    %621 = vmatprep.subr.bf16.mxu0 0
    %622 = vmatpush2.bf16.msra.mxu0 0
    %623 = vmatprep.subr.bf16.mxu0 0
    %624 = vmatpush2.bf16.msra.mxu0 0
    %625 = vmatprep.subr.bf16.mxu0 0
    %626 = vmatpush2.bf16.msra.mxu0 0
    %627 = vmatprep.subr.bf16.mxu0 0
    %628 = vmatpush2.bf16.msra.mxu0 0
    %629 = vmatprep.subr.bf16.mxu0 0
    %630 = vmatpush2.bf16.msra.mxu0 0
    %631 = vmatprep.subr.bf16.mxu0 0
    %632 = vmatpush2.bf16.msra.mxu0 0
    %633 = vmatprep.subr.bf16.mxu0 0
    %634 = vmatpush2.bf16.msra.mxu0 0
    %635 = vmatprep.mubr.bf16.mxu0 0
    %636 = vmatmul.mubr.bf16.gmra.mxu0 %v547
    %v637 = vpop.f32.mrf.mxu0
    %v638 = vadd.f32 %v453, %v637
    %v639 = vpop.f32.mrf.mxu0
    %v640 = vadd.f32 %v453, %v639
    %v641 = vpop.f32.mrf.mxu0
    %v642 = vpop.f32.mrf.mxu0
    %643 = vdwg.mxu0
    %644 = vst [vmem:[#allocation9] sm:$0xff] %v597
    %645 = vst [vmem:[#allocation9 + $0x8] sm:$0xff] %v599
    %s646 = scalar_lea.vmem [#allocation9], 16
    %647 = vst [vmem:[%s646] sm:$0xff] %v638
    %648 = vst [vmem:[%s646 + $0x8] sm:$0xff] %v640
    // Predicated region
    $region30: #{tpu_custom_call.1} parent=1 // pred_check
      _
    $region31: #{tpu_custom_call.1} parent=1 // pred_check_branch
      %650 = sbr.rel (0) target = $region33
    $region32: #{tpu_custom_call.1} parent=1 // pred_region
      %s652 = ssub.s32 512, 512
      %653 = vsyncadd [#allocation6], %s652
      %s654 = sshll.u32 [#allocation9], 4
      %s655 = int_to_ptr.vmem [resolvable:$true] %s654
      %660 = dma.vmem_to_hbm [thread:$0]  %s655, 512, %s5, [#allocation6], 256, 256, 16
    $region33: #{tpu_custom_call.1} parent=1 // pred_fallthru
      _
    // Predicated region
    $region34: #{tpu_custom_call.1} parent=1 // pred_check
      _
    $region35: #{tpu_custom_call.1} parent=1 // pred_check_branch
      %662 = sbr.rel (0) target = $region37
    $region36: #{tpu_custom_call.1} parent=1 // pred_region
      %663 = dma.done [#allocation6], 512
    $region37: #{tpu_custom_call.1} parent=1 // pred_fallthru
      _
    %664 = vsyncpa [#allocation5], 1
    %665 = vsyncpa [#allocation8], 1
    %666 = vsyncpa [#allocation6], 1

</llo_original>
